<compile_context>
chip_gen: v7x
topology: tpu7x:2x2x1
jax: 0.10.0
libtpu: 0.0.40
codegen_flags: <defaults>
</compile_context>

<pallas_src>
import functools

import jax
import jax.numpy as jnp
from jax import lax
from jax.experimental import pallas as pl
from jax.experimental.pallas import tpu as pltpu

_LN_EPS = 1e-5
# Above all default scoped limits (16/32 MiB), below v7x's 64 MiB physical VMEM per TC.
_VMEM_LIMIT = 48 * 1024 * 1024
# TODO(synk): re-derive row-tile target / vmem limit per generation (v5e/v6e/v7x).
_ROW_TILE_TARGET = 256


# ----------------------------------------------------------------------------- helpers

def _row_tile(n, target=_ROW_TILE_TARGET):
    """Row (sublane) tile: lane/MXU-friendly 256-row tiles at production sizes,
    full / 8-row tiles at toy sizes (second-to-last block dim must be 8-multiple
    or the full extent)."""
    if n >= target:
        return target
    if n > 8 and n % 8 == 0:
        return 8
    return n


def _const_spec(shape):
    """Full-array block with a constant index_map (weights stay resident across the grid)."""
    nd = len(shape)
    return pl.BlockSpec(shape, lambda *_: (0,) * nd)


def _cparams(grid_axes=1):
    return pltpu.CompilerParams(
        dimension_semantics=("parallel",) * grid_axes,
        vmem_limit_bytes=_VMEM_LIMIT)


def _cost(flops, transcendentals, bytes_accessed):
    return pl.CostEstimate(flops=int(flops), transcendentals=int(transcendentals),
                           bytes_accessed=int(bytes_accessed))


def _layernorm(x, gamma, beta):
    mu = jnp.mean(x, axis=-1, keepdims=True)
    var = jnp.mean(jnp.square(x - mu), axis=-1, keepdims=True)
    return (x - mu) * lax.rsqrt(var + _LN_EPS) * gamma + beta


# ----------------------------------------------------------------------------- kernels

def _proj_kernel(x_ref, w_ref, b_ref, o_ref):
    y = jnp.dot(x_ref[...].astype(w_ref.dtype), w_ref[...],
                preferred_element_type=jnp.float32) + b_ref[...]
    o_ref[...] = y.astype(o_ref.dtype)


def _proj_spatial_kernel(x_ref, sp_ref, w_ref, b_ref, o_ref):
    y = jnp.dot(x_ref[...].astype(w_ref.dtype), w_ref[...],
                preferred_element_type=jnp.float32) + b_ref[...]
    o_ref[...] = (y + sp_ref[...]).astype(o_ref.dtype)


def _attn_block_kernel(x_ref, wq_ref, wk_ref, wv_ref, bq_ref, bk_ref, bv_ref,
                       wo_ref, bo_ref, g_ref, beta_ref, o_ref, *, heads, scale):
    """One batch: per-head SDPA (fori_loop, accumulated out-proj) -> +x -> LayerNorm1."""
    x = x_ref[...]                               # (S, D) fp32
    xb = x.astype(wq_ref.dtype)                  # bf16 MXU operand

    def head_body(h, acc):
        q = jnp.dot(xb, wq_ref[h], preferred_element_type=jnp.float32) + bq_ref[h]
        k = jnp.dot(xb, wk_ref[h], preferred_element_type=jnp.float32) + bk_ref[h]
        v = jnp.dot(xb, wv_ref[h], preferred_element_type=jnp.float32) + bv_ref[h]
        s = lax.dot_general(q.astype(jnp.bfloat16), k.astype(jnp.bfloat16),
                            (((1,), (1,)), ((), ())),
                            preferred_element_type=jnp.float32) * scale
        s = s - jnp.max(s, axis=-1, keepdims=True)           # fp32 softmax
        p = jnp.exp(s)
        p = p / jnp.sum(p, axis=-1, keepdims=True)            # exact normalization
        ctx = jnp.dot(p.astype(jnp.bfloat16), v.astype(jnp.bfloat16),
                      preferred_element_type=jnp.float32)     # (S, dh)
        # fold the output projection per head and accumulate (no lane concat)
        return acc + jnp.dot(ctx.astype(jnp.bfloat16), wo_ref[h],
                             preferred_element_type=jnp.float32)

    # TODO(synk): flash-style KV tiling (online-softmax m/l/acc) for long sequences.
    attn = lax.fori_loop(0, heads, head_body, jnp.zeros_like(x))
    y = x + attn + bo_ref[...]
    o_ref[...] = _layernorm(y, g_ref[...], beta_ref[...]).astype(o_ref.dtype)


def _ffn_block_kernel(x_ref, w1_ref, b1_ref, w2_ref, b2_ref, g_ref, beta_ref, o_ref):
    """Row tile: Linear -> GELU(exact) -> Linear -> +x -> LayerNorm2."""
    x = x_ref[...]                               # (TM, D) fp32
    h = jnp.dot(x.astype(w1_ref.dtype), w1_ref[...],
                preferred_element_type=jnp.float32) + b1_ref[...]
    h = jax.nn.gelu(h, approximate=False)        # PyTorch F.gelu default (erf), fp32
    y = x + jnp.dot(h.astype(w2_ref.dtype), w2_ref[...],
                    preferred_element_type=jnp.float32) + b2_ref[...]
    o_ref[...] = _layernorm(y, g_ref[...], beta_ref[...]).astype(o_ref.dtype)


def _heads_kernel(f_ref, pr_w1_ref, pr_b1_ref, pr_w2_ref, pr_b2_ref,
                  cc_w_ref, cc_b_ref, o_ref, *, num_classes, pad):
    """All four output heads fused; LN affines pre-folded into the weights."""
    f = f_ref[...]                               # (TM, D) fp32
    # shared LN statistics (all heads normalize the same feature tensor)
    mu = jnp.mean(f, axis=-1, keepdims=True)
    var = jnp.mean(jnp.square(f - mu), axis=-1, keepdims=True)
    fn = (f - mu) * lax.rsqrt(var + _LN_EPS)
    fb = fn.astype(pr_w1_ref.dtype)

    # pos+rot stage 1 fused into one lane-dense matmul: (TM, D) @ (D, 2*h2)
    h = jnp.dot(fb, pr_w1_ref[...], preferred_element_type=jnp.float32) + pr_b1_ref[...]
    h = jax.nn.gelu(h, approximate=False)
    # stage 2 block-diagonal: (TM, 2*h2) @ (2*h2, 9) -> [pos(3) | rot(6)]
    pr = jnp.dot(h.astype(pr_w2_ref.dtype), pr_w2_ref[...],
                 preferred_element_type=jnp.float32) + pr_b2_ref[...]
    pos = pr[:, 0:3]
    # 6D-rotation Gram-Schmidt normalization (fp32, F.normalize eps = 1e-12)
    a1 = pr[:, 3:6]
    a2 = pr[:, 6:9]
    a1 = a1 / jnp.maximum(jnp.sqrt(jnp.sum(a1 * a1, axis=-1, keepdims=True)), 1e-12)
    a2 = a2 - jnp.sum(a1 * a2, axis=-1, keepdims=True) * a1
    a2 = a2 / jnp.maximum(jnp.sqrt(jnp.sum(a2 * a2, axis=-1, keepdims=True)), 1e-12)

    # conf + cls fused into one matmul: (TM, D) @ (D, 1+C)
    cc = jnp.dot(fb, cc_w_ref[...], preferred_element_type=jnp.float32) + cc_b_ref[...]
    conf = jax.nn.sigmoid(cc[:, 0:1])
    cls = cc[:, 1:]

    # write directly into lane slices of the 128-lane-padded output slab
    o_ref[:, 0:3] = pos.astype(o_ref.dtype)
    o_ref[:, 3:6] = a1.astype(o_ref.dtype)
    o_ref[:, 6:9] = a2.astype(o_ref.dtype)
    o_ref[:, 9:10] = conf.astype(o_ref.dtype)
    o_ref[:, 10:10 + num_classes] = cls.astype(o_ref.dtype)
    if pad:
        o_ref[:, 10 + num_classes:] = jnp.zeros((f.shape[0], pad), o_ref.dtype)


# ----------------------------------------------------------------------------- wrappers

def input_projection(x, w, b, spatial=None):
    n, din = x.shape
    dout = w.shape[1]
    tm = _row_tile(n)
    grid = (pl.cdiv(n, tm),)
    row = lambda i: (i, 0)
    cost = _cost(flops=2 * n * din * dout, transcendentals=0,
                 bytes_accessed=4 * n * (din + 2 * dout) + 2 * din * dout)
    if spatial is None:
        return pl.pallas_call(
            _proj_kernel,
            out_shape=jax.ShapeDtypeStruct((n, dout), jnp.float32),
            grid=grid,
            in_specs=[pl.BlockSpec((tm, din), row),
                      _const_spec((din, dout)), _const_spec((1, dout))],
            out_specs=pl.BlockSpec((tm, dout), row),
            compiler_params=_cparams(), cost_estimate=cost,
        )(x, w, b)
    return pl.pallas_call(
        _proj_spatial_kernel,
        out_shape=jax.ShapeDtypeStruct((n, dout), jnp.float32),
        grid=grid,
        in_specs=[pl.BlockSpec((tm, din), row), pl.BlockSpec((tm, dout), row),
                  _const_spec((din, dout)), _const_spec((1, dout))],
        out_specs=pl.BlockSpec((tm, dout), row),
        compiler_params=_cparams(), cost_estimate=cost,
    )(x, spatial, w, b)


def attention_block(x, lp, *, num_heads):
    """Self-attention + residual + LN1, gridded per batch (no cross-batch mask needed)."""
    b, s, d = x.shape
    dh = d // num_heads
    scale = 1.0 / float(dh) ** 0.5
    batch_spec = pl.BlockSpec((None, s, d), lambda i: (i, 0, 0))
    cost = _cost(flops=b * (8 * s * d * d + 4 * s * s * d),
                 transcendentals=b * num_heads * s * s,
                 bytes_accessed=8 * b * s * d + 8 * d * d)
    return pl.pallas_call(
        functools.partial(_attn_block_kernel, heads=num_heads, scale=scale),
        out_shape=jax.ShapeDtypeStruct((b, s, d), jnp.float32),
        grid=(b,),
        in_specs=[batch_spec,
                  _const_spec((num_heads, d, dh)), _const_spec((num_heads, d, dh)),
                  _const_spec((num_heads, d, dh)),
                  _const_spec((num_heads, 1, dh)), _const_spec((num_heads, 1, dh)),
                  _const_spec((num_heads, 1, dh)),
                  _const_spec((num_heads, dh, d)), _const_spec((1, d)),
                  _const_spec((1, d)), _const_spec((1, d))],
        out_specs=batch_spec,
        compiler_params=_cparams(), cost_estimate=cost,
    )(x, lp["wq"], lp["wk"], lp["wv"], lp["bq"], lp["bk"], lp["bv"],
      lp["wo"], lp["bo"], lp["ln1_g"], lp["ln1_b"])


def ffn_block(x, lp):
    """FFN + residual + LN2, row-tiled over all B*S tokens."""
    b, s, d = x.shape
    n = b * s
    mlp = lp["w_ff1"].shape[1]
    tm = _row_tile(n)
    row = lambda i: (i, 0)
    cost = _cost(flops=4 * n * d * mlp, transcendentals=n * mlp,
                 bytes_accessed=8 * n * d + 4 * d * mlp)
    y = pl.pallas_call(
        _ffn_block_kernel,
        out_shape=jax.ShapeDtypeStruct((n, d), jnp.float32),
        grid=(pl.cdiv(n, tm),),
        in_specs=[pl.BlockSpec((tm, d), row),
                  _const_spec((d, mlp)), _const_spec((1, mlp)),
                  _const_spec((mlp, d)), _const_spec((1, d)),
                  _const_spec((1, d)), _const_spec((1, d))],
        out_specs=pl.BlockSpec((tm, d), row),
        compiler_params=_cparams(), cost_estimate=cost,
    )(x.reshape(n, d), lp["w_ff1"], lp["b_ff1"], lp["w_ff2"], lp["b_ff2"],
      lp["ln2_g"], lp["ln2_b"])
    return y.reshape(b, s, d)


def output_heads(f2, params, num_classes):
    n, d = f2.shape
    h2 = params["pos_w1"].shape[1]
    total = 3 + 6 + 1 + num_classes
    out_w = ((total + 127) // 128) * 128             # lane-dense padded output slab
    pad = out_w - total

    # Fold each head's LayerNorm affine into its first Linear: W' = diag(g) W, b' = b + beta W
    def fold(g, beta, w, bias):
        return g[:, None] * w, bias + beta @ w

    pw1, pb1 = fold(params["pos_ln_g"], params["pos_ln_b"], params["pos_w1"], params["pos_b1"])
    rw1, rb1 = fold(params["rot_ln_g"], params["rot_ln_b"], params["rot_w1"], params["rot_b1"])
    cw, cb = fold(params["conf_ln_g"], params["conf_ln_b"], params["conf_w"], params["conf_b"])
    kw, kb = fold(params["cls_ln_g"], params["cls_ln_b"], params["cls_w"], params["cls_b"])

    pr_w1 = jnp.concatenate([pw1, rw1], axis=1).astype(jnp.bfloat16)       # (D, 2*h2)
    pr_b1 = jnp.concatenate([pb1, rb1]).reshape(1, 2 * h2)
    pr_w2 = jnp.zeros((2 * h2, 9), jnp.float32)
    pr_w2 = pr_w2.at[:h2, 0:3].set(params["pos_w2"]).at[h2:, 3:9].set(params["rot_w2"])
    pr_w2 = pr_w2.astype(jnp.bfloat16)                                     # block-diagonal
    pr_b2 = jnp.concatenate([params["pos_b2"], params["rot_b2"]]).reshape(1, 9)
    cc_w = jnp.concatenate([cw, kw], axis=1).astype(jnp.bfloat16)          # (D, 1+C)
    cc_b = jnp.concatenate([cb, kb]).reshape(1, 1 + num_classes)

    tm = _row_tile(n)
    row = lambda i: (i, 0)
    cost = _cost(flops=2 * n * d * (2 * h2 + 1 + num_classes) + 2 * n * 2 * h2 * 9,
                 transcendentals=n * (2 * h2 + 1),
                 bytes_accessed=4 * n * (d + out_w) + 2 * d * (2 * h2 + 1 + num_classes))

    return pl.pallas_call(
        functools.partial(_heads_kernel, num_classes=num_classes, pad=pad),
        out_shape=jax.ShapeDtypeStruct((n, out_w), jnp.float32),
        grid=(pl.cdiv(n, tm),),
        in_specs=[pl.BlockSpec((tm, d), row),
                  _const_spec((d, 2 * h2)), _const_spec((1, 2 * h2)),
                  _const_spec((2 * h2, 9)), _const_spec((1, 9)),
                  _const_spec((d, 1 + num_classes)), _const_spec((1, 1 + num_classes))],
        out_specs=pl.BlockSpec((tm, out_w), row),
        compiler_params=_cparams(), cost_estimate=cost,
    )(f2, pr_w1, pr_b1, pr_w2, pr_b2, cc_w, cc_b)


# ----------------------------------------------------------------------------- model

def object_pose_encoder_forward(params, object_patches, spatial_encoding=None):
    """Forward pass of ObjectPoseEncoder (object_ids=None path)."""
    cfg = params["cfg"]
    b, p, _ = object_patches.shape
    d = cfg["hidden_dim"]
    m = cfg["max_objects"]
    num_classes = cfg["num_classes"]

    # input projection (+ optional spatial encoding), fused, row-tiled
    sp2 = None if spatial_encoding is None else spatial_encoding.reshape(b * p, d)
    x = input_projection(object_patches.reshape(b * p, -1),
                         params["w_proj"], params["b_proj"], sp2)          # (B*P, D)

    # TODO(synk): object_ids embedding-lookup path (ragged per-batch python lists) is
    # not implemented; this reproduces the object_ids=None branch (learned queries).
    obj = jnp.broadcast_to(params["object_queries"][None], (b, m, d))
    x = jnp.concatenate([obj, x.reshape(b, p, d)], axis=1)                 # (B, S, D)

    for lp in params["layers"]:
        x = attention_block(x, lp, num_heads=cfg["num_heads"])
        x = ffn_block(x, lp)

    feat = x[:, :m]                                                        # (B, M, D)

    heads = output_heads(feat.reshape(b * m, d), params, num_classes)      # (B*M, 128)
    positions = heads[:, 0:3].reshape(b, m, 3)
    rotations = heads[:, 3:9].reshape(b, m, 6)
    confidence = heads[:, 9:10].reshape(b, m)
    class_logits = heads[:, 10:10 + num_classes].reshape(b, m, num_classes)

    return {"positions": positions, "rotations": rotations, "confidence": confidence,
            "class_logits": class_logits, "features": feat}


# ----------------------------------------------------------------------------- params

def init_params(key, *, input_dim, hidden_dim, num_layers, num_heads, mlp_dim,
                max_objects, num_classes=100):
    keys = iter(jax.random.split(key, 1024))
    bf = jnp.bfloat16

    def nrm(shape, dtype=jnp.float32):
        return (jax.random.normal(next(keys), shape, jnp.float32) * 0.02).astype(dtype)

    def zeros(shape):
        return jnp.zeros(shape, jnp.float32)

    def ones(shape):
        return jnp.ones(shape, jnp.float32)

    d, h2 = hidden_dim, hidden_dim // 2
    dh = hidden_dim // num_heads

    layers = []
    for _ in range(num_layers):
        layers.append(dict(
            wq=nrm((num_heads, d, dh), bf), wk=nrm((num_heads, d, dh), bf),
            wv=nrm((num_heads, d, dh), bf),
            bq=zeros((num_heads, 1, dh)), bk=zeros((num_heads, 1, dh)),
            bv=zeros((num_heads, 1, dh)),
            wo=nrm((num_heads, dh, d), bf), bo=zeros((1, d)),
            ln1_g=ones((1, d)), ln1_b=zeros((1, d)),
            w_ff1=nrm((d, mlp_dim), bf), b_ff1=zeros((1, mlp_dim)),
            w_ff2=nrm((mlp_dim, d), bf), b_ff2=zeros((1, d)),
            ln2_g=ones((1, d)), ln2_b=zeros((1, d)),
        ))

    return dict(
        cfg=dict(hidden_dim=d, num_heads=num_heads, max_objects=max_objects,
                 num_classes=num_classes),
        w_proj=nrm((input_dim, d), bf), b_proj=zeros((1, d)),
        object_queries=nrm((max_objects, d)),
        layers=layers,
        pos_ln_g=ones((d,)), pos_ln_b=zeros((d,)),
        pos_w1=nrm((d, h2)), pos_b1=zeros((h2,)),
        pos_w2=nrm((h2, 3)), pos_b2=zeros((3,)),
        rot_ln_g=ones((d,)), rot_ln_b=zeros((d,)),
        rot_w1=nrm((d, h2)), rot_b1=zeros((h2,)),
        rot_w2=nrm((h2, 6)), rot_b2=zeros((6,)),
        conf_ln_g=ones((d,)), conf_ln_b=zeros((d,)),
        conf_w=nrm((d, 1)), conf_b=zeros((1,)),
        cls_ln_g=ones((d,)), cls_ln_b=zeros((d,)),
        cls_w=nrm((d, num_classes)), cls_b=zeros((num_classes,)),
    )


# ----------------------------------------------------------------------------- main

if __name__ == "__main__":
    # Small, deterministic config (module defaults scaled down).
    B, NUM_PATCHES = 2, 8
    INPUT_DIM, HIDDEN, HEADS, LAYERS, MLP, MAX_OBJ = 48, 32, 4, 2, 64, 4

    key = jax.random.PRNGKey(0)
    kp, kx, ks = jax.random.split(key, 3)

    params = init_params(kp, input_dim=INPUT_DIM, hidden_dim=HIDDEN,
                         num_layers=LAYERS, num_heads=HEADS, mlp_dim=MLP,
                         max_objects=MAX_OBJ)

    object_patches = jax.random.normal(kx, (B, NUM_PATCHES, INPUT_DIM), jnp.float32)
    spatial_encoding = jax.random.normal(ks, (B, NUM_PATCHES, HIDDEN), jnp.float32) * 0.1

    out = object_pose_encoder_forward(params, object_patches, spatial_encoding)
    jax.block_until_ready(out)

    assert out["positions"].shape == (B, MAX_OBJ, 3)
    assert out["rotations"].shape == (B, MAX_OBJ, 6)
    assert out["confidence"].shape == (B, MAX_OBJ)
    assert out["class_logits"].shape == (B, MAX_OBJ, 100)
    assert out["features"].shape == (B, MAX_OBJ, HIDDEN)
    print("KERNEL_OK")
</pallas_src>

<mosaic_0001>
module attributes {stable_mosaic.version = 11 : i64} {
  func.func @_proj_spatial_kernel(%arg0: i32, %arg1: memref<8x48xf32, #tpu.memory_space<vmem>>, %arg2: memref<8x32xf32, #tpu.memory_space<vmem>>, %arg3: memref<48x32xbf16, #tpu.memory_space<vmem>>, %arg4: memref<1x32xf32, #tpu.memory_space<vmem>>, %arg5: memref<8x32xf32, #tpu.memory_space<vmem>>) attributes {dimension_semantics = [#tpu.dimension_semantics<parallel>], iteration_bounds = array<i64: 2>, scalar_prefetch = 0 : i64, scratch_operands = 0 : i64, tpu.core_type = #tpu.core_type<tc>, window_params = [{transform_indices = @transform_0, window_bounds = array<i64: 8, 48>}, {transform_indices = @transform_1, window_bounds = array<i64: 8, 32>}, {pipeline_mode = #tpu.pipeline_mode<synchronous>, transform_indices = @transform_2, window_bounds = array<i64: 48, 32>}, {pipeline_mode = #tpu.pipeline_mode<synchronous>, transform_indices = @transform_3, window_bounds = array<i64: 1, 32>}, {transform_indices = @transform_4, window_bounds = array<i64: 8, 32>}]} {
    %c0 = arith.constant 0 : index
    %c0_0 = arith.constant 0 : index
    %0 = vector.load %arg1[%c0, %c0_0] : memref<8x48xf32, #tpu.memory_space<vmem>>, vector<8x48xf32>
    %1 = arith.truncf %0 : vector<8x48xf32> to vector<8x48xbf16>
    %c0_1 = arith.constant 0 : index
    %c0_2 = arith.constant 0 : index
    %2 = vector.load %arg3[%c0_1, %c0_2] : memref<48x32xbf16, #tpu.memory_space<vmem>>, vector<48x32xbf16>
    %cst = arith.constant dense<0.000000e+00> : vector<8x32xf32>
    %3 = tpu.matmul %1, %2, %cst {dimension_numbers = #tpu.dot_dimension_numbers<[1], [0], [0], [1], [0, 0, 1, 1], [], []>} : vector<8x48xbf16>, vector<48x32xbf16>, vector<8x32xf32> -> vector<8x32xf32>
    %c0_3 = arith.constant 0 : index
    %c0_4 = arith.constant 0 : index
    %4 = vector.load %arg4[%c0_3, %c0_4] : memref<1x32xf32, #tpu.memory_space<vmem>>, vector<1x32xf32>
    %5 = vector.broadcast %4 : vector<1x32xf32> to vector<8x32xf32>
    %6 = arith.addf %3, %5 : vector<8x32xf32>
    %c0_5 = arith.constant 0 : index
    %c0_6 = arith.constant 0 : index
    %7 = vector.load %arg2[%c0_5, %c0_6] : memref<8x32xf32, #tpu.memory_space<vmem>>, vector<8x32xf32>
    %8 = arith.addf %6, %7 : vector<8x32xf32>
    %c0_7 = arith.constant 0 : index
    %c0_8 = arith.constant 0 : index
    %9 = vector.load %arg5[%c0_7, %c0_8] : memref<8x32xf32, #tpu.memory_space<vmem>>, vector<8x32xf32>
    tpu.vector_store %arg5[%c0_7, %c0_8], %8 {strides = array<i32>} : memref<8x32xf32, #tpu.memory_space<vmem>>, vector<8x32xf32>,
    return
  }
  func.func @transform_0(%arg0: i32) -> (i32, i32) {
    %c0_i32 = arith.constant 0 : i32
    %c0_i32_0 = arith.constant 0 : i32
    return %arg0, %c0_i32 : i32, i32
  }
  func.func @transform_1(%arg0: i32) -> (i32, i32) {
    %c0_i32 = arith.constant 0 : i32
    %c0_i32_0 = arith.constant 0 : i32
    return %arg0, %c0_i32 : i32, i32
  }
  func.func @transform_2(%arg0: i32) -> (i32, i32) {
    %c0_i32 = arith.constant 0 : i32
    %c0_i32_0 = arith.constant 0 : i32
    %c0_i32_1 = arith.constant 0 : i32
    return %c0_i32, %c0_i32_0 : i32, i32
  }
  func.func @transform_3(%arg0: i32) -> (i32, i32) {
    %c0_i32 = arith.constant 0 : i32
    %c0_i32_0 = arith.constant 0 : i32
    %c0_i32_1 = arith.constant 0 : i32
    return %c0_i32, %c0_i32_0 : i32, i32
  }
  func.func @transform_4(%arg0: i32) -> (i32, i32) {
    %c0_i32 = arith.constant 0 : i32
    %c0_i32_0 = arith.constant 0 : i32
    return %arg0, %c0_i32 : i32, i32
  }
}

</mosaic_0001>

<llo_original>
// kernel: tpu_custom_call.1
$region0: #{tpu_custom_call.1}
  #allocation0 [shape = 'u32[]', space=smem, size = 0x4, offset = 0x4, fixed_abs, tag = 'smem constant byte address 0x4 - core index']
  #allocation1 [shape = 'u32[144,128]{1,0:T(1,128)}', space=vmem, size = 0x12000, scoped, tag = 'internal scratch']
  %s0 = inlined_call_operand.vmem [shape: f32[16,48], index: 0, kind: input, shape index: {}]
  %s1 = inlined_call_operand.vmem [shape: f32[16,32], index: 1, kind: input, shape index: {}]
  %s2 = inlined_call_operand.vmem [shape: bf16[48,32], index: 2, kind: input, shape index: {}]
  %s3 = inlined_call_operand.vmem [shape: f32[1,32], index: 3, kind: input, shape index: {}]
  %s4 = inlined_call_operand.hbm [shape: f32[16,32], index: 4, kind: output, shape index: {}]
  %s5 = sld [smem:[#allocation0]]
  $region49: #{tpu_custom_call.1} parent=0
    _
  %s7 = ssub.s32 1, %s5
  %s8 = scalar_select 0, %s7, %s5
  $region1: #{tpu_custom_call.1} parent=0
    #allocation2 [shape = 'u8[8192]{0}', space=vmem, size = 0x2000, scoped, tag = 'output window, operand 0']
    #allocation3 [shape = 's32[2]{0}', space=sflag, size = 0x8, scoped, tag = 'scoped memory for tpu_custom_call.1']
    %9 = vsyncpa [#allocation3], 0
    %s10 = scalar_lea.sflag [#allocation3], 1
    %11 = vsyncpa %s10, 0
    loop: start=0, step=1, limit=4
    $region2: #{tpu_custom_call.1} parent=1 // loop_pre_header
      _
    $region3: #{tpu_custom_call.1} parent=1 // loop_header
      %s13 = sphi 0, %s17
      %p14 = scmp.ge.s32.totalorder %s13, 4
      %s23 = sphi 0, %s25
      %s26 = sphi 0, %s23
      %s27 = sphi 0, %s26
      %s43 = sphi 0, %s27
      %s49 = sphi 0, %s51
      %s52 = sphi 0, %s49
      %s53 = sphi 0, %s52
      %s69 = sphi 0, %s53
      %s73 = sphi 0, %s73
      %s75 = sphi 0, %s73
      %s76 = sphi 0, %s75
      %s90 = sphi 0, %s76
      %s94 = sphi 0, %s94
      %s96 = sphi 0, %s94
      %s97 = sphi 0, %s96
      %s111 = sphi 0, %s97
      %s117 = sphi 0, %s119
      %s120 = sphi 0, %s117
      %s121 = sphi 0, %s120
      %s137 = sphi 0, %s121
    $region4: #{tpu_custom_call.1} parent=1 // loop_header_branch
      %16 = sbr.rel (%p14) target = $region8
    $region5: #{tpu_custom_call.1} parent=1 // loop_body
      %s18 = ssub.s32 %s13, 1
      %s19 = ssub.s32 %s13, 2
      %s20 = sadd.s32 %s13, 1
      %s21 = ssub.s32 %s13, %s20
      %p22 = scmp.eq.s32.totalorder %s21, 0
      %s24 = sadd.s32 %s23, 1
      %s25 = scalar_select %p22, %s23, %s24
      %p28 = pneg %p22
      %p29 = scmp.eq.s32.totalorder %s13, 1
      %p30 = por %p28, %p29
      %p31 = scmp.ne.s32.totalorder %s23, %s26
      %p32 = scmp.eq.s32.totalorder %s13, 0
      %p33 = por %p31, %p32
      %p34 = scmp.ne.s32.totalorder %s23, %s26
      %p35 = scmp.eq.s32.totalorder %s18, 1
      %p36 = por %p34, %p35
      %p37 = scmp.ne.s32.totalorder %s26, %s27
      %p38 = scmp.eq.s32.totalorder %s18, 0
      %p39 = por %p37, %p38
      %p40 = scmp.ne.s32.totalorder %s26, %s27
      %p41 = scmp.eq.s32.totalorder %s19, 1
      %p42 = por %p40, %p41
      %p44 = scmp.ne.s32.totalorder %s27, %s43
      %p45 = scmp.eq.s32.totalorder %s19, 0
      %p46 = por %p44, %p45
      %s47 = ssub.s32 %s13, %s20
      %p48 = scmp.eq.s32.totalorder %s47, 0
      %s50 = sadd.s32 %s49, 1
      %s51 = scalar_select %p48, %s49, %s50
      %p54 = pneg %p48
      %p55 = scmp.eq.s32.totalorder %s13, 1
      %p56 = por %p54, %p55
      %p57 = scmp.ne.s32.totalorder %s49, %s52
      %p58 = scmp.eq.s32.totalorder %s13, 0
      %p59 = por %p57, %p58
      %p60 = scmp.ne.s32.totalorder %s49, %s52
      %p61 = scmp.eq.s32.totalorder %s18, 1
      %p62 = por %p60, %p61
      %p63 = scmp.ne.s32.totalorder %s52, %s53
      %p64 = scmp.eq.s32.totalorder %s18, 0
      %p65 = por %p63, %p64
      %p66 = scmp.ne.s32.totalorder %s52, %s53
      %p67 = scmp.eq.s32.totalorder %s19, 1
      %p68 = por %p66, %p67
      %p70 = scmp.ne.s32.totalorder %s53, %s69
      %p71 = scmp.eq.s32.totalorder %s19, 0
      %p72 = por %p70, %p71
      %s74 = sadd.s32 %s73, 1
      %p77 = scmp.eq.s32.totalorder %s13, 1
      %p78 = scmp.ne.s32.totalorder %s73, %s75
      %p79 = scmp.eq.s32.totalorder %s13, 0
      %p80 = por %p78, %p79
      %p81 = scmp.ne.s32.totalorder %s73, %s75
      %p82 = scmp.eq.s32.totalorder %s18, 1
      %p83 = por %p81, %p82
      %p84 = scmp.ne.s32.totalorder %s75, %s76
      %p85 = scmp.eq.s32.totalorder %s18, 0
      %p86 = por %p84, %p85
      %p87 = scmp.ne.s32.totalorder %s75, %s76
      %p88 = scmp.eq.s32.totalorder %s19, 1
      %p89 = por %p87, %p88
      %p91 = scmp.ne.s32.totalorder %s76, %s90
      %p92 = scmp.eq.s32.totalorder %s19, 0
      %p93 = por %p91, %p92
      %s95 = sadd.s32 %s94, 1
      %p98 = scmp.eq.s32.totalorder %s13, 1
      %p99 = scmp.ne.s32.totalorder %s94, %s96
      %p100 = scmp.eq.s32.totalorder %s13, 0
      %p101 = por %p99, %p100
      %p102 = scmp.ne.s32.totalorder %s94, %s96
      %p103 = scmp.eq.s32.totalorder %s18, 1
      %p104 = por %p102, %p103
      %p105 = scmp.ne.s32.totalorder %s96, %s97
      %p106 = scmp.eq.s32.totalorder %s18, 0
      %p107 = por %p105, %p106
      %p108 = scmp.ne.s32.totalorder %s96, %s97
      %p109 = scmp.eq.s32.totalorder %s19, 1
      %p110 = por %p108, %p109
      %p112 = scmp.ne.s32.totalorder %s97, %s111
      %p113 = scmp.eq.s32.totalorder %s19, 0
      %p114 = por %p112, %p113
      %s115 = ssub.s32 %s13, %s20
      %p116 = scmp.eq.s32.totalorder %s115, 0
      %s118 = sadd.s32 %s117, 1
      %s119 = scalar_select %p116, %s117, %s118
      %p122 = pneg %p116
      %p123 = scmp.eq.s32.totalorder %s13, 1
      %p124 = por %p122, %p123
      %p125 = scmp.ne.s32.totalorder %s117, %s120
      %p126 = scmp.eq.s32.totalorder %s13, 0
      %p127 = por %p125, %p126
      %p128 = scmp.ne.s32.totalorder %s117, %s120
      %p129 = scmp.eq.s32.totalorder %s18, 1
      %p130 = por %p128, %p129
      %p131 = scmp.ne.s32.totalorder %s120, %s121
      %p132 = scmp.eq.s32.totalorder %s18, 0
      %p133 = por %p131, %p132
      %p134 = scmp.ne.s32.totalorder %s120, %s121
      %p135 = scmp.eq.s32.totalorder %s19, 1
      %p136 = por %p134, %p135
      %p138 = scmp.ne.s32.totalorder %s121, %s137
      %p139 = scmp.eq.s32.totalorder %s19, 0
      %p140 = por %p138, %p139
      %p141 = scmp.le.s32.totalorder 1, %s13
      %p142 = scmp.lt.s32.totalorder %s13, 3
      %p143 = pnand %p141, %p142
      %p144 = pneg %p143
      // Predicated region
      $region9: #{tpu_custom_call.1} parent=5 // pred_check
        _
      $region10: #{tpu_custom_call.1} parent=5 // pred_check_branch
        %146 = sbr.rel (%p143) target = $region12
      $region11: #{tpu_custom_call.1} parent=5 // pred_region
        %s147 = ssub.s32 %s13, 1
        // Predicated region
        $region13: #{tpu_custom_call.1} parent=11 // pred_check
          %p148 = pneg %p86
        $region14: #{tpu_custom_call.1} parent=11 // pred_check_branch
          %150 = sbr.rel (%p148) target = $region16
        $region15: #{tpu_custom_call.1} parent=11 // pred_region
          _
        $region16: #{tpu_custom_call.1} parent=11 // pred_fallthru
          _
        // Predicated region
        $region17: #{tpu_custom_call.1} parent=11 // pred_check
          %p151 = pneg %p107
        $region18: #{tpu_custom_call.1} parent=11 // pred_check_branch
          %153 = sbr.rel (%p151) target = $region20
        $region19: #{tpu_custom_call.1} parent=11 // pred_region
          _
        $region20: #{tpu_custom_call.1} parent=11 // pred_fallthru
          _
      $region12: #{tpu_custom_call.1} parent=5 // pred_fallthru
        _
      %p154 = scmp.lt.s32.totalorder %s13, 2
      // Predicated region
      $region21: #{tpu_custom_call.1} parent=5 // pred_check
        %p155 = pneg %p154
      $region22: #{tpu_custom_call.1} parent=5 // pred_check_branch
        %157 = sbr.rel (%p155) target = $region24
      $region23: #{tpu_custom_call.1} parent=5 // pred_region
        // Predicated region
        $region25: #{tpu_custom_call.1} parent=23 // pred_check
          %p158 = pneg %p33
        $region26: #{tpu_custom_call.1} parent=23 // pred_check_branch
          %160 = sbr.rel (%p158) target = $region28
        $region27: #{tpu_custom_call.1} parent=23 // pred_region
          %p161 = scmp.lt.s32.totalorder %s13, 1
          %s162 = scalar_select %p161, %s13, 1
          %s163 = smul.addr %s162, 8
          %s164 = scalar_lea.vmem %s0, %s163
        $region28: #{tpu_custom_call.1} parent=23 // pred_fallthru
          _
        // Predicated region
        $region29: #{tpu_custom_call.1} parent=23 // pred_check
          %p165 = pneg %p59
        $region30: #{tpu_custom_call.1} parent=23 // pred_check_branch
          %167 = sbr.rel (%p165) target = $region32
        $region31: #{tpu_custom_call.1} parent=23 // pred_region
          %p168 = scmp.lt.s32.totalorder %s13, 1
          %s169 = scalar_select %p168, %s13, 1
          %s170 = smul.addr %s169, 8
          %s171 = scalar_lea.vmem %s1, %s170
        $region32: #{tpu_custom_call.1} parent=23 // pred_fallthru
          _
      $region24: #{tpu_custom_call.1} parent=5 // pred_fallthru
        _
      %p172 = scmp.le.s32.totalorder 1, %s13
      %p173 = scmp.lt.s32.totalorder %s13, 3
      %p174 = pnand %p172, %p173
      %p175 = pneg %p174
      // Predicated region
      $region33: #{tpu_custom_call.1} parent=5 // pred_check
        _
      $region34: #{tpu_custom_call.1} parent=5 // pred_check_branch
        %177 = sbr.rel (%p174) target = $region36
      $region35: #{tpu_custom_call.1} parent=5 // pred_region
        %s178 = ssub.s32 %s13, 1
        %p179 = scmp.lt.s32.totalorder %s18, 1
        %s180 = scalar_select %p179, %s18, 1
        %s181 = smul.addr %s180, 8
        %s182 = scalar_lea.vmem %s0, %s181
        %p183 = pneg %p39
        %p184 = pneg %p36
        %p185 = scmp.lt.s32.totalorder %s18, 1
        %s186 = scalar_select %p185, %s18, 1
        %s187 = smul.addr %s186, 8
        %s188 = scalar_lea.vmem %s1, %s187
        %p189 = pneg %p65
        %p190 = pneg %p62
        %p191 = pneg %p86
        %p192 = pneg %p83
        %p193 = pneg %p107
        %p194 = pneg %p104
        %p195 = pneg %p133
        %p196 = pneg %p130
        %s197 = sand.u32 %s120, 1
        %s198 = scalar_lea.sflag [#allocation3], %s197
        %s199 = sand.u32 %s120, 1
        %s200 = smul.addr %s199, 8
        %s201 = scalar_lea.vmem [#allocation2], %s200
        %p202 = scmp.lt.s32.totalorder %s18, 1
        %s203 = scalar_select %p202, %s18, 1
        %s204 = smul.addr %s203, 8
        %s205 = scalar_lea.vmem %s0, %s204
        %p206 = scmp.lt.s32.totalorder %s18, 1
        %s207 = scalar_select %p206, %s18, 1
        %s208 = smul.addr %s207, 8
        %s209 = scalar_lea.vmem %s1, %s208
        %v211 = vld [vmem:[%s205] sm:$0xff]
        %v212 = vpack.c.bf16 %v211, %v211
        %v213 = vld [vmem:[%s2] sm:$0xf]
        %v214 = vld [vmem:[%s2 + $0x4] sm:$0xf]
        %v215 = vld [vmem:[%s2 + $0x8] sm:$0xf]
        %v216 = vld [vmem:[%s2 + $0xc] sm:$0xf]
        %v217 = vld [vmem:[%s2 + $0x10] sm:$0xf]
        %v218 = vld [vmem:[%s2 + $0x14] sm:$0xf]
        %v219 = vld [vmem:[%s3] sm:$0x1]
        %v221 = vlaneseq
        %v222 = vshrl.u32 %v221, 7
        %v223 = vsub.s32 0, %v222
        %v224 = vrot.slane %v219, %v223
        %v232 = vunpack.c.l.b16 %v213
        %v233 = vunpack.c.l.b16 %v214
        %v234 = vunpack.c.l.b16 %v215
        %v235 = vunpack.c.l.b16 %v216
        %v236 = vunpack.c.l.b16 %v217
        %v237 = vunpack.c.l.b16 %v218
        %v238 = vpack.c.b16 %v233, %v232
        %v239 = vpack.c.b16 %v235, %v234
        %v240 = vpack.c.b16 %v237, %v236
        %vm244 = vcmask 392192
        %v246 = vsel %vm244, %v212, 0
        %248 = vmatprep.subr.bf16.mxu0 0
        %249 = vmatpush1.bf16.msra.mxu0 %v238
        %250 = vmatprep.subr.bf16.mxu0 0
        %251 = vmatpush1.bf16.msra.mxu0 %v239
        %252 = vmatprep.subr.bf16.mxu0 0
        %253 = vmatpush1.bf16.msra.mxu0 %v240
        %254 = vmatprep.subr.bf16.mxu0 0
        %255 = vmatpush1.bf16.msra.mxu0 0
        %256 = vmatprep.subr.bf16.mxu0 0
        %257 = vmatpush1.bf16.msra.mxu0 0
        %258 = vmatprep.subr.bf16.mxu0 0
        %259 = vmatpush1.bf16.msra.mxu0 0
        %260 = vmatprep.subr.bf16.mxu0 0
        %261 = vmatpush1.bf16.msra.mxu0 0
        %262 = vmatprep.subr.bf16.mxu0 0
        %263 = vmatpush1.bf16.msra.mxu0 0
        %264 = vmatprep.subr.bf16.mxu0 0
        %265 = vmatpush1.bf16.msra.mxu0 0
        %266 = vmatprep.subr.bf16.mxu0 0
        %267 = vmatpush1.bf16.msra.mxu0 0
        %268 = vmatprep.subr.bf16.mxu0 0
        %269 = vmatpush1.bf16.msra.mxu0 0
        %270 = vmatprep.subr.bf16.mxu0 0
        %271 = vmatpush1.bf16.msra.mxu0 0
        %272 = vmatprep.subr.bf16.mxu0 0
        %273 = vmatpush1.bf16.msra.mxu0 0
        %274 = vmatprep.subr.bf16.mxu0 0
        %275 = vmatpush1.bf16.msra.mxu0 0
        %276 = vmatprep.subr.bf16.mxu0 0
        %277 = vmatpush1.bf16.msra.mxu0 0
        %278 = vmatprep.subr.bf16.mxu0 0
        %279 = vmatpush1.bf16.msra.mxu0 0
        %280 = vmatprep.mubr.bf16.mxu0 0
        %281 = vmatmul.mubr.bf16.gmra.mrb[0].mxu0 %v246
        %v282 = vpop.f32.mrb[0].mxu0
        %v283 = vadd.f32 %v224, %v282
        %v284 = vpop.f32.mrb[0].mxu0
        %v285 = vpop.f32.mrb[0].mxu0
        %v286 = vpop.f32.mrb[0].mxu0
        %287 = vdwg.mxu0
        %v288 = vld [vmem:[%s209] sm:$0xff]
        %v289 = vadd.f32 %v283, %v288
        %vm290 = vcmask 261120
        %291 = vst.msk [vmem:[%s201] sm:$0xff] %vm290, %v289
        %s292 = sand.u32 %s120, 1
        %s293 = scalar_lea.sflag [#allocation3], %s292
        %s294 = sand.u32 %s120, 1
        %s295 = smul.addr %s294, 8
        %s296 = scalar_lea.vmem [#allocation2], %s295
        // Predicated region
        $region37: #{tpu_custom_call.1} parent=35 // pred_check
          %p297 = pneg %p130
        $region38: #{tpu_custom_call.1} parent=35 // pred_check_branch
          %299 = sbr.rel (%p297) target = $region40
        $region39: #{tpu_custom_call.1} parent=35 // pred_region
          %s301 = ssub.s32 128, 128
          %302 = vsyncadd %s293, %s301
          %s303 = smul.addr %s18, 128
          %s304 = scalar_lea.hbm %s4, %s303
          %s306 = sshll.u32 %s296, 4
          %s307 = int_to_ptr.vmem [resolvable:$true] %s306
          %309 = dma.vmem_to_hbm [thread:$0]  %s307, 128, %s304, %s293
        $region40: #{tpu_custom_call.1} parent=35 // pred_fallthru
          _
      $region36: #{tpu_custom_call.1} parent=5 // pred_fallthru
        _
      %p310 = scmp.le.s32.totalorder 2, %s13
      // Predicated region
      $region41: #{tpu_custom_call.1} parent=5 // pred_check
        %p311 = pneg %p310
      $region42: #{tpu_custom_call.1} parent=5 // pred_check_branch
        %313 = sbr.rel (%p311) target = $region44
      $region43: #{tpu_custom_call.1} parent=5 // pred_region
        %s314 = ssub.s32 %s13, 2
        // Predicated region
        $region45: #{tpu_custom_call.1} parent=43 // pred_check
          %p315 = pneg %p136
        $region46: #{tpu_custom_call.1} parent=43 // pred_check_branch
          %317 = sbr.rel (%p315) target = $region48
        $region47: #{tpu_custom_call.1} parent=43 // pred_region
          %s318 = sand.u32 %s121, 1
          %s319 = scalar_lea.sflag [#allocation3], %s318
          %s320 = sand.u32 %s121, 1
          %s321 = smul.addr %s320, 8
          %s322 = scalar_lea.vmem [#allocation2], %s321
          %323 = dma.done %s319, 128
        $region48: #{tpu_custom_call.1} parent=43 // pred_fallthru
          _
      $region44: #{tpu_custom_call.1} parent=5 // pred_fallthru
        _
    $region6: #{tpu_custom_call.1} parent=1 // loop_footer
      %s17 = sadd.s32 1, %s13
    $region7: #{tpu_custom_call.1} parent=1 // loop_footer_branch
      %12 = sbr.rel target = $region3
    $region8: #{tpu_custom_call.1} parent=1 // loop_exit
      _
    %324 = vsyncpa [#allocation3], 1
    %s325 = scalar_lea.sflag [#allocation3], 1
    %326 = vsyncpa %s325, 1

</llo_original>
